<compile_context>
chip_gen: v7x
topology: tpu7x:2x2x1
jax: 0.10.0
libtpu: 0.0.40
codegen_flags: <defaults>
</compile_context>

<pallas_src>
import math

import jax
import jax.numpy as jnp
from jax.experimental import pallas as pl
from jax.experimental.pallas import tpu as pltpu


def _reward_kernel(x_ref, w1_ref, b1_ref, w2_ref, b2_ref, out_ref):
    # x_ref: (tm, hid)  w1: (hid, h2)  b1: (1, h2)  w2: (h2, 1)  b2: (1, 1)
    x = x_ref[...]
    h = jnp.dot(x, w1_ref[...], preferred_element_type=jnp.float32)      # (tm, h2)
    h = jnp.maximum(h + b1_ref[...], 0.0)
    out = jnp.dot(h, w2_ref[...], preferred_element_type=jnp.float32)    # (tm, 1)
    out_ref[...] = out + b2_ref[...]


def _cdiv(a, b):
    return -(-a // b)


def _row_tiling(m):
    """Pick (grid_steps, rows_per_step) with rows_per_step a multiple of 8."""
    if m <= 1:
        steps = 1
    elif m <= 1024:
        steps = 2                       # keep both v7x TensorCores busy
    else:
        steps = max(2, _cdiv(m, 512))   # cap tile rows for pipelining
    tm = max(8, _cdiv(_cdiv(m, steps), 8) * 8)
    return steps, tm


def xavier_normal(key, fan_in, fan_out, shape):
    std = math.sqrt(2.0 / (fan_in + fan_out))
    return std * jax.random.normal(key, shape, dtype=jnp.float32)


def init_params(key, hid_dim):
    h2 = math.ceil(hid_dim / 2)
    k1, k2 = jax.random.split(key)
    return {
        # stored (in, out); xavier_normal std is symmetric in fan_in/fan_out
        "w1": xavier_normal(k1, hid_dim, h2, (hid_dim, h2)),
        "b1": jnp.zeros((1, h2), jnp.float32),
        "w2": xavier_normal(k2, h2, 1, (h2, 1)),
        "b2": jnp.zeros((1, 1), jnp.float32),
    }


def reward_estimator_forward(x, params):
    """Forward pass of RewardEstimator. x: (..., hid_dim) -> (..., 1)."""
    x = jax.lax.stop_gradient(x)        # matches x.detach(); identity in fwd
    lead = x.shape[:-1]
    hid = x.shape[-1]
    h2 = params["w1"].shape[1]
    m = math.prod(lead) if lead else 1

    x2 = x.reshape(m, hid).astype(jnp.float32)
    steps, tm = _row_tiling(m)
    m_pad = steps * tm
    if m_pad != m:
        x2 = jnp.pad(x2, ((0, m_pad - m), (0, 0)))   # glue: row padding only

    rep = lambda i: (0, 0)               # replicated (weights/biases)

    out = pl.pallas_call(
        _reward_kernel,
        out_shape=jax.ShapeDtypeStruct((m_pad, 1), jnp.float32),
        grid=(steps,),
        in_specs=[
            pl.BlockSpec((tm, hid), lambda i: (i, 0)),   # x rows
            pl.BlockSpec((hid, h2), rep),                # W1
            pl.BlockSpec((1, h2), rep),                  # b1
            pl.BlockSpec((h2, 1), rep),                  # W2
            pl.BlockSpec((1, 1), rep),                   # b2
        ],
        out_specs=pl.BlockSpec((tm, 1), lambda i: (i, 0)),
        compiler_params=pltpu.CompilerParams(dimension_semantics=("parallel",)),
    )(x2, params["w1"], params["b1"], params["w2"], params["b2"])

    return out[:m].reshape(*lead, 1)


if __name__ == "__main__":
    batch = 2
    hid_dim = 32

    key = jax.random.PRNGKey(0)
    k_params, k_x = jax.random.split(key)

    params = init_params(k_params, hid_dim)
    x = jax.random.normal(k_x, (batch, hid_dim), dtype=jnp.float32)

    out = reward_estimator_forward(x, params)
    out = jax.block_until_ready(out)

    # pure-JAX reference (full-precision matmuls) for a sanity check
    ref_h = jnp.maximum(
        jnp.dot(x, params["w1"], precision=jax.lax.Precision.HIGHEST) + params["b1"], 0.0)
    ref = jnp.dot(ref_h, params["w2"], precision=jax.lax.Precision.HIGHEST) + params["b2"]
    assert out.shape == (batch, 1), out.shape
    assert float(jnp.max(jnp.abs(out - ref))) < 1e-3

    print("KERNEL_OK")
</pallas_src>

<mosaic_0001>
module attributes {stable_mosaic.version = 11 : i64} {
  func.func @_reward_kernel(%arg0: i32, %arg1: memref<8x32xf32, #tpu.memory_space<vmem>>, %arg2: memref<32x16xf32, #tpu.memory_space<vmem>>, %arg3: memref<1x16xf32, #tpu.memory_space<vmem>>, %arg4: memref<16x1xf32, #tpu.memory_space<vmem>>, %arg5: memref<1x1xf32, #tpu.memory_space<vmem>>, %arg6: memref<8x1xf32, #tpu.memory_space<vmem>>) attributes {dimension_semantics = [#tpu.dimension_semantics<parallel>], iteration_bounds = array<i64: 2>, scalar_prefetch = 0 : i64, scratch_operands = 0 : i64, tpu.core_type = #tpu.core_type<tc>, window_params = [{transform_indices = @transform_0, window_bounds = array<i64: 8, 32>}, {pipeline_mode = #tpu.pipeline_mode<synchronous>, transform_indices = @transform_1, window_bounds = array<i64: 32, 16>}, {pipeline_mode = #tpu.pipeline_mode<synchronous>, transform_indices = @transform_2, window_bounds = array<i64: 1, 16>}, {pipeline_mode = #tpu.pipeline_mode<synchronous>, transform_indices = @transform_3, window_bounds = array<i64: 16, 1>}, {pipeline_mode = #tpu.pipeline_mode<synchronous>, transform_indices = @transform_4, window_bounds = array<i64: 1, 1>}, {transform_indices = @transform_5, window_bounds = array<i64: 8, 1>}]} {
    %c0 = arith.constant 0 : index
    %c0_0 = arith.constant 0 : index
    %0 = vector.load %arg1[%c0, %c0_0] : memref<8x32xf32, #tpu.memory_space<vmem>>, vector<8x32xf32>
    %c0_1 = arith.constant 0 : index
    %c0_2 = arith.constant 0 : index
    %1 = vector.load %arg2[%c0_1, %c0_2] : memref<32x16xf32, #tpu.memory_space<vmem>>, vector<32x16xf32>
    %cst = arith.constant dense<0.000000e+00> : vector<8x16xf32>
    %2 = tpu.matmul %0, %1, %cst {dimension_numbers = #tpu.dot_dimension_numbers<[1], [0], [0], [1], [0, 0, 1, 1], [], []>} : vector<8x32xf32>, vector<32x16xf32>, vector<8x16xf32> -> vector<8x16xf32>
    %c0_3 = arith.constant 0 : index
    %c0_4 = arith.constant 0 : index
    %3 = vector.load %arg3[%c0_3, %c0_4] : memref<1x16xf32, #tpu.memory_space<vmem>>, vector<1x16xf32>
    %4 = vector.broadcast %3 : vector<1x16xf32> to vector<8x16xf32>
    %5 = arith.addf %2, %4 : vector<8x16xf32>
    %cst_5 = arith.constant 0.000000e+00 : f32
    %6 = vector.broadcast %cst_5 : f32 to vector<8x16xf32>
    %7 = arith.maximumf %5, %6 : vector<8x16xf32>
    %c0_6 = arith.constant 0 : index
    %c0_7 = arith.constant 0 : index
    %8 = vector.load %arg4[%c0_6, %c0_7] : memref<16x1xf32, #tpu.memory_space<vmem>>, vector<16x1xf32>
    %cst_8 = arith.constant dense<0.000000e+00> : vector<8x1xf32>
    %9 = tpu.matmul %7, %8, %cst_8 {dimension_numbers = #tpu.dot_dimension_numbers<[1], [0], [0], [1], [0, 0, 1, 1], [], []>} : vector<8x16xf32>, vector<16x1xf32>, vector<8x1xf32> -> vector<8x1xf32>
    %c0_9 = arith.constant 0 : index
    %c0_10 = arith.constant 0 : index
    %10 = vector.load %arg5[%c0_9, %c0_10] : memref<1x1xf32, #tpu.memory_space<vmem>>, vector<1x1xf32>
    %11 = vector.broadcast %10 : vector<1x1xf32> to vector<8x1xf32>
    %12 = arith.addf %9, %11 : vector<8x1xf32>
    %c0_11 = arith.constant 0 : index
    %c0_12 = arith.constant 0 : index
    %13 = vector.load %arg6[%c0_11, %c0_12] : memref<8x1xf32, #tpu.memory_space<vmem>>, vector<8x1xf32>
    tpu.vector_store %arg6[%c0_11, %c0_12], %12 {strides = array<i32>} : memref<8x1xf32, #tpu.memory_space<vmem>>, vector<8x1xf32>,
    return
  }
  func.func @transform_0(%arg0: i32) -> (i32, i32) {
    %c0_i32 = arith.constant 0 : i32
    %c0_i32_0 = arith.constant 0 : i32
    return %arg0, %c0_i32 : i32, i32
  }
  func.func @transform_1(%arg0: i32) -> (i32, i32) {
    %c0_i32 = arith.constant 0 : i32
    %c0_i32_0 = arith.constant 0 : i32
    %c0_i32_1 = arith.constant 0 : i32
    return %c0_i32, %c0_i32_0 : i32, i32
  }
  func.func @transform_2(%arg0: i32) -> (i32, i32) {
    %c0_i32 = arith.constant 0 : i32
    %c0_i32_0 = arith.constant 0 : i32
    %c0_i32_1 = arith.constant 0 : i32
    return %c0_i32, %c0_i32_0 : i32, i32
  }
  func.func @transform_3(%arg0: i32) -> (i32, i32) {
    %c0_i32 = arith.constant 0 : i32
    %c0_i32_0 = arith.constant 0 : i32
    %c0_i32_1 = arith.constant 0 : i32
    return %c0_i32, %c0_i32_0 : i32, i32
  }
  func.func @transform_4(%arg0: i32) -> (i32, i32) {
    %c0_i32 = arith.constant 0 : i32
    %c0_i32_0 = arith.constant 0 : i32
    %c0_i32_1 = arith.constant 0 : i32
    return %c0_i32, %c0_i32_0 : i32, i32
  }
  func.func @transform_5(%arg0: i32) -> (i32, i32) {
    %c0_i32 = arith.constant 0 : i32
    %c0_i32_0 = arith.constant 0 : i32
    return %arg0, %c0_i32 : i32, i32
  }
}

</mosaic_0001>

<llo_original>
// kernel: tpu_custom_call.1
$region0: #{tpu_custom_call.1}
  #allocation0 [shape = 'u32[]', space=smem, size = 0x4, offset = 0x4, fixed_abs, tag = 'smem constant byte address 0x4 - core index']
  #allocation1 [shape = 'u32[144,128]{1,0:T(1,128)}', space=vmem, size = 0x12000, scoped, tag = 'internal scratch']
  #allocation2 [shape = 'f32[1,1]{1,0:T(1,128)S(1)}', space=vmem, size = 0x200, scoped, tag = 'scoped memory for tpu_custom_call.1']
  %s0 = inlined_call_operand.vmem [shape: f32[16,32], index: 0, kind: input, shape index: {}]
  %s1 = inlined_call_operand.vmem [shape: f32[32,16], index: 1, kind: input, shape index: {}]
  %s2 = inlined_call_operand.vmem [shape: f32[1,16], index: 2, kind: input, shape index: {}]
  %s3 = inlined_call_operand.vmem [shape: f32[16,1], index: 3, kind: input, shape index: {}]
  %s4 = inlined_call_operand.<no memory space> [shape: f32[1,1], index: 4, kind: input, shape index: {}]
  %s5 = inlined_call_operand.vmem [shape: f32[16,1], index: 5, kind: output, shape index: {}]
  %s6 = sld [smem:[#allocation0]]
  $region53: #{tpu_custom_call.1} parent=0
    _
  %s8 = ssub.s32 1, %s6
  %s9 = scalar_select 0, %s8, %s6
  %v10 = vstv %s4
  %11 = vst [vmem:[#allocation2] sm:$0x1] %v10
  loop: start=0, step=1, limit=4
  $region2: #{tpu_custom_call.1} parent=0 // loop_pre_header
    _
  $region3: #{tpu_custom_call.1} parent=0 // loop_header
    %s13 = sphi 0, %s17
    %p14 = scmp.ge.s32.totalorder %s13, 4
    %s23 = sphi 0, %s25
    %s26 = sphi 0, %s23
    %s27 = sphi 0, %s26
    %s43 = sphi 0, %s27
    %s47 = sphi 0, %s47
    %s49 = sphi 0, %s47
    %s50 = sphi 0, %s49
    %s64 = sphi 0, %s50
    %s68 = sphi 0, %s68
    %s70 = sphi 0, %s68
    %s71 = sphi 0, %s70
    %s85 = sphi 0, %s71
    %s89 = sphi 0, %s89
    %s91 = sphi 0, %s89
    %s92 = sphi 0, %s91
    %s106 = sphi 0, %s92
    %s110 = sphi 0, %s110
    %s112 = sphi 0, %s110
    %s113 = sphi 0, %s112
    %s127 = sphi 0, %s113
    %s133 = sphi 0, %s135
    %s136 = sphi 0, %s133
    %s137 = sphi 0, %s136
    %s153 = sphi 0, %s137
  $region4: #{tpu_custom_call.1} parent=0 // loop_header_branch
    %16 = sbr.rel (%p14) target = $region8
  $region5: #{tpu_custom_call.1} parent=0 // loop_body
    %s18 = ssub.s32 %s13, 1
    %s19 = ssub.s32 %s13, 2
    %s20 = sadd.s32 %s13, 1
    %s21 = ssub.s32 %s13, %s20
    %p22 = scmp.eq.s32.totalorder %s21, 0
    %s24 = sadd.s32 %s23, 1
    %s25 = scalar_select %p22, %s23, %s24
    %p28 = pneg %p22
    %p29 = scmp.eq.s32.totalorder %s13, 1
    %p30 = por %p28, %p29
    %p31 = scmp.ne.s32.totalorder %s23, %s26
    %p32 = scmp.eq.s32.totalorder %s13, 0
    %p33 = por %p31, %p32
    %p34 = scmp.ne.s32.totalorder %s23, %s26
    %p35 = scmp.eq.s32.totalorder %s18, 1
    %p36 = por %p34, %p35
    %p37 = scmp.ne.s32.totalorder %s26, %s27
    %p38 = scmp.eq.s32.totalorder %s18, 0
    %p39 = por %p37, %p38
    %p40 = scmp.ne.s32.totalorder %s26, %s27
    %p41 = scmp.eq.s32.totalorder %s19, 1
    %p42 = por %p40, %p41
    %p44 = scmp.ne.s32.totalorder %s27, %s43
    %p45 = scmp.eq.s32.totalorder %s19, 0
    %p46 = por %p44, %p45
    %s48 = sadd.s32 %s47, 1
    %p51 = scmp.eq.s32.totalorder %s13, 1
    %p52 = scmp.ne.s32.totalorder %s47, %s49
    %p53 = scmp.eq.s32.totalorder %s13, 0
    %p54 = por %p52, %p53
    %p55 = scmp.ne.s32.totalorder %s47, %s49
    %p56 = scmp.eq.s32.totalorder %s18, 1
    %p57 = por %p55, %p56
    %p58 = scmp.ne.s32.totalorder %s49, %s50
    %p59 = scmp.eq.s32.totalorder %s18, 0
    %p60 = por %p58, %p59
    %p61 = scmp.ne.s32.totalorder %s49, %s50
    %p62 = scmp.eq.s32.totalorder %s19, 1
    %p63 = por %p61, %p62
    %p65 = scmp.ne.s32.totalorder %s50, %s64
    %p66 = scmp.eq.s32.totalorder %s19, 0
    %p67 = por %p65, %p66
    %s69 = sadd.s32 %s68, 1
    %p72 = scmp.eq.s32.totalorder %s13, 1
    %p73 = scmp.ne.s32.totalorder %s68, %s70
    %p74 = scmp.eq.s32.totalorder %s13, 0
    %p75 = por %p73, %p74
    %p76 = scmp.ne.s32.totalorder %s68, %s70
    %p77 = scmp.eq.s32.totalorder %s18, 1
    %p78 = por %p76, %p77
    %p79 = scmp.ne.s32.totalorder %s70, %s71
    %p80 = scmp.eq.s32.totalorder %s18, 0
    %p81 = por %p79, %p80
    %p82 = scmp.ne.s32.totalorder %s70, %s71
    %p83 = scmp.eq.s32.totalorder %s19, 1
    %p84 = por %p82, %p83
    %p86 = scmp.ne.s32.totalorder %s71, %s85
    %p87 = scmp.eq.s32.totalorder %s19, 0
    %p88 = por %p86, %p87
    %s90 = sadd.s32 %s89, 1
    %p93 = scmp.eq.s32.totalorder %s13, 1
    %p94 = scmp.ne.s32.totalorder %s89, %s91
    %p95 = scmp.eq.s32.totalorder %s13, 0
    %p96 = por %p94, %p95
    %p97 = scmp.ne.s32.totalorder %s89, %s91
    %p98 = scmp.eq.s32.totalorder %s18, 1
    %p99 = por %p97, %p98
    %p100 = scmp.ne.s32.totalorder %s91, %s92
    %p101 = scmp.eq.s32.totalorder %s18, 0
    %p102 = por %p100, %p101
    %p103 = scmp.ne.s32.totalorder %s91, %s92
    %p104 = scmp.eq.s32.totalorder %s19, 1
    %p105 = por %p103, %p104
    %p107 = scmp.ne.s32.totalorder %s92, %s106
    %p108 = scmp.eq.s32.totalorder %s19, 0
    %p109 = por %p107, %p108
    %s111 = sadd.s32 %s110, 1
    %p114 = scmp.eq.s32.totalorder %s13, 1
    %p115 = scmp.ne.s32.totalorder %s110, %s112
    %p116 = scmp.eq.s32.totalorder %s13, 0
    %p117 = por %p115, %p116
    %p118 = scmp.ne.s32.totalorder %s110, %s112
    %p119 = scmp.eq.s32.totalorder %s18, 1
    %p120 = por %p118, %p119
    %p121 = scmp.ne.s32.totalorder %s112, %s113
    %p122 = scmp.eq.s32.totalorder %s18, 0
    %p123 = por %p121, %p122
    %p124 = scmp.ne.s32.totalorder %s112, %s113
    %p125 = scmp.eq.s32.totalorder %s19, 1
    %p126 = por %p124, %p125
    %p128 = scmp.ne.s32.totalorder %s113, %s127
    %p129 = scmp.eq.s32.totalorder %s19, 0
    %p130 = por %p128, %p129
    %s131 = ssub.s32 %s13, %s20
    %p132 = scmp.eq.s32.totalorder %s131, 0
    %s134 = sadd.s32 %s133, 1
    %s135 = scalar_select %p132, %s133, %s134
    %p138 = pneg %p132
    %p139 = scmp.eq.s32.totalorder %s13, 1
    %p140 = por %p138, %p139
    %p141 = scmp.ne.s32.totalorder %s133, %s136
    %p142 = scmp.eq.s32.totalorder %s13, 0
    %p143 = por %p141, %p142
    %p144 = scmp.ne.s32.totalorder %s133, %s136
    %p145 = scmp.eq.s32.totalorder %s18, 1
    %p146 = por %p144, %p145
    %p147 = scmp.ne.s32.totalorder %s136, %s137
    %p148 = scmp.eq.s32.totalorder %s18, 0
    %p149 = por %p147, %p148
    %p150 = scmp.ne.s32.totalorder %s136, %s137
    %p151 = scmp.eq.s32.totalorder %s19, 1
    %p152 = por %p150, %p151
    %p154 = scmp.ne.s32.totalorder %s137, %s153
    %p155 = scmp.eq.s32.totalorder %s19, 0
    %p156 = por %p154, %p155
    %p157 = scmp.le.s32.totalorder 1, %s13
    %p158 = scmp.lt.s32.totalorder %s13, 3
    %p159 = pnand %p157, %p158
    %p160 = pneg %p159
    // Predicated region
    $region9: #{tpu_custom_call.1} parent=5 // pred_check
      _
    $region10: #{tpu_custom_call.1} parent=5 // pred_check_branch
      %162 = sbr.rel (%p159) target = $region12
    $region11: #{tpu_custom_call.1} parent=5 // pred_region
      %s163 = ssub.s32 %s13, 1
      // Predicated region
      $region13: #{tpu_custom_call.1} parent=11 // pred_check
        %p164 = pneg %p60
      $region14: #{tpu_custom_call.1} parent=11 // pred_check_branch
        %166 = sbr.rel (%p164) target = $region16
      $region15: #{tpu_custom_call.1} parent=11 // pred_region
        _
      $region16: #{tpu_custom_call.1} parent=11 // pred_fallthru
        _
      // Predicated region
      $region17: #{tpu_custom_call.1} parent=11 // pred_check
        %p167 = pneg %p81
      $region18: #{tpu_custom_call.1} parent=11 // pred_check_branch
        %169 = sbr.rel (%p167) target = $region20
      $region19: #{tpu_custom_call.1} parent=11 // pred_region
        _
      $region20: #{tpu_custom_call.1} parent=11 // pred_fallthru
        _
      // Predicated region
      $region21: #{tpu_custom_call.1} parent=11 // pred_check
        %p170 = pneg %p102
      $region22: #{tpu_custom_call.1} parent=11 // pred_check_branch
        %172 = sbr.rel (%p170) target = $region24
      $region23: #{tpu_custom_call.1} parent=11 // pred_region
        _
      $region24: #{tpu_custom_call.1} parent=11 // pred_fallthru
        _
      // Predicated region
      $region25: #{tpu_custom_call.1} parent=11 // pred_check
        %p173 = pneg %p123
      $region26: #{tpu_custom_call.1} parent=11 // pred_check_branch
        %175 = sbr.rel (%p173) target = $region28
      $region27: #{tpu_custom_call.1} parent=11 // pred_region
        _
      $region28: #{tpu_custom_call.1} parent=11 // pred_fallthru
        _
    $region12: #{tpu_custom_call.1} parent=5 // pred_fallthru
      _
    %p176 = scmp.lt.s32.totalorder %s13, 2
    // Predicated region
    $region29: #{tpu_custom_call.1} parent=5 // pred_check
      %p177 = pneg %p176
    $region30: #{tpu_custom_call.1} parent=5 // pred_check_branch
      %179 = sbr.rel (%p177) target = $region32
    $region31: #{tpu_custom_call.1} parent=5 // pred_region
      // Predicated region
      $region33: #{tpu_custom_call.1} parent=31 // pred_check
        %p180 = pneg %p33
      $region34: #{tpu_custom_call.1} parent=31 // pred_check_branch
        %182 = sbr.rel (%p180) target = $region36
      $region35: #{tpu_custom_call.1} parent=31 // pred_region
        %p183 = scmp.lt.s32.totalorder %s13, 1
        %s184 = scalar_select %p183, %s13, 1
        %s185 = smul.addr %s184, 8
        %s186 = scalar_lea.vmem %s0, %s185
      $region36: #{tpu_custom_call.1} parent=31 // pred_fallthru
        _
    $region32: #{tpu_custom_call.1} parent=5 // pred_fallthru
      _
    %p187 = scmp.le.s32.totalorder 1, %s13
    %p188 = scmp.lt.s32.totalorder %s13, 3
    %p189 = pnand %p187, %p188
    %p190 = pneg %p189
    // Predicated region
    $region37: #{tpu_custom_call.1} parent=5 // pred_check
      _
    $region38: #{tpu_custom_call.1} parent=5 // pred_check_branch
      %192 = sbr.rel (%p189) target = $region40
    $region39: #{tpu_custom_call.1} parent=5 // pred_region
      %s193 = ssub.s32 %s13, 1
      %p194 = scmp.lt.s32.totalorder %s18, 1
      %s195 = scalar_select %p194, %s18, 1
      %s196 = smul.addr %s195, 8
      %s197 = scalar_lea.vmem %s0, %s196
      %p198 = pneg %p39
      %p199 = pneg %p36
      %p200 = pneg %p60
      %p201 = pneg %p57
      %p202 = pneg %p81
      %p203 = pneg %p78
      %p204 = pneg %p102
      %p205 = pneg %p99
      %p206 = pneg %p123
      %p207 = pneg %p120
      %p208 = pneg %p149
      %p209 = pneg %p146
      %p210 = scmp.lt.s32.totalorder %s18, 1
      %s211 = scalar_select %p210, %s18, 1
      %s212 = smul.addr %s211, 8
      %s213 = scalar_lea.vmem %s5, %s212
      %p214 = scmp.lt.s32.totalorder %s18, 1
      %s215 = scalar_select %p214, %s18, 1
      %s216 = smul.addr %s215, 8
      %s217 = scalar_lea.vmem %s0, %s216
      %p218 = scmp.lt.s32.totalorder %s18, 1
      %s219 = scalar_select %p218, %s18, 1
      %s220 = smul.addr %s219, 8
      %s221 = scalar_lea.vmem %s5, %s220
      %v222 = vld [vmem:[%s217] sm:$0xff]
      %v223 = vld [vmem:[%s1] sm:$0xff]
      %v224 = vld [vmem:[%s1 + $0x8] sm:$0xff]
      %v225 = vld [vmem:[%s1 + $0x10] sm:$0xff]
      %v226 = vld [vmem:[%s1 + $0x18] sm:$0xff]
      %v227 = vld [vmem:[%s2] sm:$0x1]
      %v229 = vlaneseq
      %v230 = vshrl.u32 %v229, 7
      %v231 = vsub.s32 0, %v230
      %v232 = vrot.slane %v227, %v231
      %vm234 = vcmask 261120
      %v236 = vsel %vm234, %v222, 0
      %238 = vmatprep.subr.mxu0 0.0
      %239 = vmatpush1.msra.mxu0 %v223
      %240 = vmatprep.subr.mxu0 0.0
      %241 = vmatpush1.msra.mxu0 %v224
      %242 = vmatprep.subr.mxu0 0.0
      %243 = vmatpush1.msra.mxu0 %v225
      %244 = vmatprep.subr.mxu0 0.0
      %245 = vmatpush1.msra.mxu0 %v226
      %246 = vmatprep.subr.mxu0 0.0
      %247 = vmatpush1.msra.mxu0 0.0
      %248 = vmatprep.subr.mxu0 0.0
      %249 = vmatpush1.msra.mxu0 0.0
      %250 = vmatprep.subr.mxu0 0.0
      %251 = vmatpush1.msra.mxu0 0.0
      %252 = vmatprep.subr.mxu0 0.0
      %253 = vmatpush1.msra.mxu0 0.0
      %254 = vmatprep.subr.mxu0 0.0
      %255 = vmatpush1.msra.mxu0 0.0
      %256 = vmatprep.subr.mxu0 0.0
      %257 = vmatpush1.msra.mxu0 0.0
      %258 = vmatprep.subr.mxu0 0.0
      %259 = vmatpush1.msra.mxu0 0.0
      %260 = vmatprep.subr.mxu0 0.0
      %261 = vmatpush1.msra.mxu0 0.0
      %262 = vmatprep.subr.mxu0 0.0
      %263 = vmatpush1.msra.mxu0 0.0
      %264 = vmatprep.subr.mxu0 0.0
      %265 = vmatpush1.msra.mxu0 0.0
      %266 = vmatprep.subr.mxu0 0.0
      %267 = vmatpush1.msra.mxu0 0.0
      %268 = vmatprep.subr.mxu0 0.0
      %269 = vmatpush1.msra.mxu0 0.0
      %270 = vmatprep.subr.mxu0 0.0
      %271 = vmatpush1.msra.mxu0 0.0
      %272 = vmatprep.subr.mxu0 0.0
      %273 = vmatpush1.msra.mxu0 0.0
      %274 = vmatprep.subr.mxu0 0.0
      %275 = vmatpush1.msra.mxu0 0.0
      %276 = vmatprep.subr.mxu0 0.0
      %277 = vmatpush1.msra.mxu0 0.0
      %278 = vmatprep.subr.mxu0 0.0
      %279 = vmatpush1.msra.mxu0 0.0
      %280 = vmatprep.subr.mxu0 0.0
      %281 = vmatpush1.msra.mxu0 0.0
      %282 = vmatprep.subr.mxu0 0.0
      %283 = vmatpush1.msra.mxu0 0.0
      %284 = vmatprep.subr.mxu0 0.0
      %285 = vmatpush1.msra.mxu0 0.0
      %286 = vmatprep.subr.mxu0 0.0
      %287 = vmatpush1.msra.mxu0 0.0
      %288 = vmatprep.subr.mxu0 0.0
      %289 = vmatpush1.msra.mxu0 0.0
      %290 = vmatprep.subr.mxu0 0.0
      %291 = vmatpush1.msra.mxu0 0.0
      %292 = vmatprep.subr.mxu0 0.0
      %293 = vmatpush1.msra.mxu0 0.0
      %294 = vmatprep.subr.mxu0 0.0
      %295 = vmatpush1.msra.mxu0 0.0
      %296 = vmatprep.subr.mxu0 0.0
      %297 = vmatpush1.msra.mxu0 0.0
      %298 = vmatprep.subr.mxu0 0.0
      %299 = vmatpush1.msra.mxu0 0.0
      %300 = vmatprep.subr.mxu0 0.0
      %301 = vmatpush1.msra.mxu0 0.0
      %302 = vmatprep.mubr.f32.mxu0 0.0
      %303 = vmatmul.mubr.f32.gmra.mrb[0].mxu0 %v236
      %v304 = vpop.f32.mrb[0].mxu0
      %v305 = vadd.f32 %v232, %v304
      %v306 = vpop.f32.mrb[0].mxu0
      %307 = vdwg.mxu0
      %v308 = vmax.f32 %v305, 0.0
      %v309 = vld [vmem:[%s3] sm:$0xff]
      %v310 = vld [vmem:[%s3 + $0x8] sm:$0xff]
      %v311 = vld [vmem:[#allocation2] sm:$0x1]
      %v313 = vlaneseq
      %v314 = vshrl.u32 %v313, 7
      %v315 = vsub.s32 0, %v314
      %v316 = vrot.slane %v311, %v315
      %vm318 = vcmask 130048
      %v320 = vsel %vm318, %v308, 0
      %322 = vmatprep.subr.mxu0 0.0
      %323 = vmatpush1.msra.mxu0 %v309
      %324 = vmatprep.subr.mxu0 0.0
      %325 = vmatpush1.msra.mxu0 %v310
      %326 = vmatprep.subr.mxu0 0.0
      %327 = vmatpush1.msra.mxu0 0.0
      %328 = vmatprep.subr.mxu0 0.0
      %329 = vmatpush1.msra.mxu0 0.0
      %330 = vmatprep.subr.mxu0 0.0
      %331 = vmatpush1.msra.mxu0 0.0
      %332 = vmatprep.subr.mxu0 0.0
      %333 = vmatpush1.msra.mxu0 0.0
      %334 = vmatprep.subr.mxu0 0.0
      %335 = vmatpush1.msra.mxu0 0.0
      %336 = vmatprep.subr.mxu0 0.0
      %337 = vmatpush1.msra.mxu0 0.0
      %338 = vmatprep.subr.mxu0 0.0
      %339 = vmatpush1.msra.mxu0 0.0
      %340 = vmatprep.subr.mxu0 0.0
      %341 = vmatpush1.msra.mxu0 0.0
      %342 = vmatprep.subr.mxu0 0.0
      %343 = vmatpush1.msra.mxu0 0.0
      %344 = vmatprep.subr.mxu0 0.0
      %345 = vmatpush1.msra.mxu0 0.0
      %346 = vmatprep.subr.mxu0 0.0
      %347 = vmatpush1.msra.mxu0 0.0
      %348 = vmatprep.subr.mxu0 0.0
      %349 = vmatpush1.msra.mxu0 0.0
      %350 = vmatprep.subr.mxu0 0.0
      %351 = vmatpush1.msra.mxu0 0.0
      %352 = vmatprep.subr.mxu0 0.0
      %353 = vmatpush1.msra.mxu0 0.0
      %354 = vmatprep.subr.mxu0 0.0
      %355 = vmatpush1.msra.mxu0 0.0
      %356 = vmatprep.subr.mxu0 0.0
      %357 = vmatpush1.msra.mxu0 0.0
      %358 = vmatprep.subr.mxu0 0.0
      %359 = vmatpush1.msra.mxu0 0.0
      %360 = vmatprep.subr.mxu0 0.0
      %361 = vmatpush1.msra.mxu0 0.0
      %362 = vmatprep.subr.mxu0 0.0
      %363 = vmatpush1.msra.mxu0 0.0
      %364 = vmatprep.subr.mxu0 0.0
      %365 = vmatpush1.msra.mxu0 0.0
      %366 = vmatprep.subr.mxu0 0.0
      %367 = vmatpush1.msra.mxu0 0.0
      %368 = vmatprep.subr.mxu0 0.0
      %369 = vmatpush1.msra.mxu0 0.0
      %370 = vmatprep.subr.mxu0 0.0
      %371 = vmatpush1.msra.mxu0 0.0
      %372 = vmatprep.subr.mxu0 0.0
      %373 = vmatpush1.msra.mxu0 0.0
      %374 = vmatprep.subr.mxu0 0.0
      %375 = vmatpush1.msra.mxu0 0.0
      %376 = vmatprep.subr.mxu0 0.0
      %377 = vmatpush1.msra.mxu0 0.0
      %378 = vmatprep.subr.mxu0 0.0
      %379 = vmatpush1.msra.mxu0 0.0
      %380 = vmatprep.subr.mxu0 0.0
      %381 = vmatpush1.msra.mxu0 0.0
      %382 = vmatprep.subr.mxu0 0.0
      %383 = vmatpush1.msra.mxu0 0.0
      %384 = vmatprep.subr.mxu0 0.0
      %385 = vmatpush1.msra.mxu0 0.0
      %386 = vmatprep.mubr.f32.mxu0 0.0
      %387 = vmatmul.mubr.f32.gmra.mrb[0].mxu0 %v320
      %v388 = vpop.f32.mrb[0].mxu0
      %v389 = vadd.f32 %v316, %v388
      %v390 = vpop.f32.mrb[0].mxu0
      %391 = vdwg.mxu0
      %vm392 = vcmask 7168
      %393 = vst.msk [vmem:[%s221] sm:$0xff] %vm392, %v389
      %p394 = scmp.lt.s32.totalorder %s18, 1
      %s395 = scalar_select %p394, %s18, 1
      %s396 = smul.addr %s395, 8
      %s397 = scalar_lea.vmem %s5, %s396
      // Predicated region
      $region41: #{tpu_custom_call.1} parent=39 // pred_check
        %p398 = pneg %p146
      $region42: #{tpu_custom_call.1} parent=39 // pred_check_branch
        %400 = sbr.rel (%p398) target = $region44
      $region43: #{tpu_custom_call.1} parent=39 // pred_region
        _
      $region44: #{tpu_custom_call.1} parent=39 // pred_fallthru
        _
    $region40: #{tpu_custom_call.1} parent=5 // pred_fallthru
      _
    %p401 = scmp.le.s32.totalorder 2, %s13
    // Predicated region
    $region45: #{tpu_custom_call.1} parent=5 // pred_check
      %p402 = pneg %p401
    $region46: #{tpu_custom_call.1} parent=5 // pred_check_branch
      %404 = sbr.rel (%p402) target = $region48
    $region47: #{tpu_custom_call.1} parent=5 // pred_region
      %s405 = ssub.s32 %s13, 2
      // Predicated region
      $region49: #{tpu_custom_call.1} parent=47 // pred_check
        %p406 = pneg %p152
      $region50: #{tpu_custom_call.1} parent=47 // pred_check_branch
        %408 = sbr.rel (%p406) target = $region52
      $region51: #{tpu_custom_call.1} parent=47 // pred_region
        %p409 = scmp.lt.s32.totalorder %s19, 1
        %s410 = scalar_select %p409, %s19, 1
        %s411 = smul.addr %s410, 8
        %s412 = scalar_lea.vmem %s5, %s411
      $region52: #{tpu_custom_call.1} parent=47 // pred_fallthru
        _
    $region48: #{tpu_custom_call.1} parent=5 // pred_fallthru
      _
  $region6: #{tpu_custom_call.1} parent=0 // loop_footer
    %s17 = sadd.s32 1, %s13
  $region7: #{tpu_custom_call.1} parent=0 // loop_footer_branch
    %12 = sbr.rel target = $region3
  $region8: #{tpu_custom_call.1} parent=0 // loop_exit
    _

</llo_original>
